<compile_context>
chip_gen: v5e
topology: v5e:2x2
jax: 0.10.0
libtpu: 0.0.40
codegen_flags: <defaults>
</compile_context>

<pallas_src>
import functools

import jax
import jax.numpy as jnp
from jax.experimental import pallas as pl
from jax.experimental.pallas import tpu as pltpu

LANE = 128         # lane width (last dim of every block)
BM_TARGET = 8192   # rows per block -> 4 MiB per f32 input block; 16 MiB total
                   # double-buffered, under the 32 MiB scoped VMEM limit on
                   # every generation (v7x physical VMEM is 64 MiB).
NCORES = 2         # leading "parallel" grid axis: shards blocks across the two
                   # v7x TensorCores; harmless on single-core v5e / v6e.


def _charbonnier_kernel(x_ref, y_ref, o_ref, *, eps, rows, bm,
                        blocks_per_core, needs_mask):
    """Accumulate per-(sublane, lane) partial sums of sqrt(d^2 + eps^2)."""
    j = pl.program_id(1)

    @pl.when(j == 0)
    def _init():
        o_ref[...] = jnp.zeros_like(o_ref)

    eps2 = jnp.float32(eps) * jnp.float32(eps)
    d = x_ref[...].astype(jnp.float32) - y_ref[...].astype(jnp.float32)
    v = jnp.sqrt(d * d + eps2)

    def accumulate(vals):
        # (bm, LANE) -> (bm//8, 8, LANE) is a layout-trivial sublane split;
        # summing axis 0 is pure vreg adds (no XLU). The 8->1 sublane and
        # cross-lane reductions happen once, in JAX, outside the kernel.
        o_ref[...] += vals.reshape(bm // 8, 8, LANE).sum(axis=0)

    if not needs_mask:
        # Every block fully valid: hot path, no masking anywhere.
        accumulate(v)
    else:
        c = pl.program_id(0)
        g = c * blocks_per_core + j          # unclamped global block index
        num_full = rows // bm                # blocks whose rows are all valid

        @pl.when(g < num_full)
        def _full_block():
            accumulate(v)

        @pl.when(g >= num_full)
        def _ragged_block():
            # Row-index-only mask (the sub-128 tail is handled outside the
            # kernel, so no lane mask is needed). For the phantom duplicate
            # block (odd total_blocks) `valid` <= 0, masking it out entirely.
            # OOB rows of the last real block are Pallas safe-but-garbage
            # reads, zeroed here before accumulation.
            valid = rows - g * bm
            ridx = jax.lax.broadcasted_iota(jnp.int32, (bm, 1), 0)
            accumulate(jnp.where(ridx < valid, v, jnp.float32(0.0)))


def charbonnier_loss(x, y, eps=1e-3):
    """Pallas TPU Charbonnier loss. x, y: same shape (e.g. NCHW). f32 scalar."""
    assert x.shape == y.shape, "x and y must have the same shape"
    n = int(x.size)
    assert n > 0

    xf = jnp.ravel(x)   # free (bitcast) reshape for contiguous inputs
    yf = jnp.ravel(y)
    eps2 = jnp.float32(eps) * jnp.float32(eps)

    rows = n // LANE          # full 128-wide rows handled by the kernel
    tail = n - rows * LANE    # < 128 leftover elements handled in plain JAX

    if rows < 8:
        # Tiny input: below one (8, 128) tile — not worth a kernel launch.
        d = xf.astype(jnp.float32) - yf.astype(jnp.float32)
        return jnp.mean(jnp.sqrt(d * d + eps2))

    x2 = xf[: rows * LANE].reshape(rows, LANE)
    y2 = yf[: rows * LANE].reshape(rows, LANE)

    # Sublane block size: as large as BM_TARGET (amortizes grid-step overhead),
    # never larger than the array, always a multiple of 8 (f32 tiling).
    # bf16 inputs also work (cast to f32 in-kernel); BM_TARGET is a multiple of
    # 16 so large bf16 inputs keep native (16, 128) tiling as well.
    if rows >= BM_TARGET:
        bm = BM_TARGET
    else:
        bm = (rows // 8) * 8

    total_blocks = -(-rows // bm)
    ncores = NCORES if total_blocks >= 2 else 1
    blocks_per_core = -(-total_blocks // ncores)
    # Masking is needed if the last real block is partial, or if an odd block
    # count forces one phantom (duplicated, masked-to-zero) grid step.
    needs_mask = (rows % bm != 0) or (ncores * blocks_per_core != total_blocks)

    def in_index_map(c, j):
        g = c * blocks_per_core + j
        # Clamp the phantom duplicate block into range so its DMA never starts
        # past the end of the array; its contribution is masked to zero.
        return (jnp.minimum(g, total_blocks - 1), 0)

    kernel = functools.partial(
        _charbonnier_kernel,
        eps=float(eps), rows=rows, bm=bm,
        blocks_per_core=blocks_per_core, needs_mask=needs_mask,
    )
    # NOTE: eps / shape / dtype are baked in, so each distinct combination
    # recompiles — same behavior as any shape-specialized JAX program.

    in_bytes = rows * LANE * (x.dtype.itemsize + y.dtype.itemsize)
    partials = pl.pallas_call(
        kernel,
        out_shape=jax.ShapeDtypeStruct((ncores * 8, LANE), jnp.float32),
        grid_spec=pltpu.PrefetchScalarGridSpec(
            num_scalar_prefetch=0,
            grid=(ncores, blocks_per_core),
            in_specs=[
                pl.BlockSpec((bm, LANE), in_index_map),
                pl.BlockSpec((bm, LANE), in_index_map),
            ],
            out_specs=pl.BlockSpec((8, LANE), lambda c, j: (c, 0)),
        ),
        compiler_params=pltpu.CompilerParams(
            # Leading axis shards blocks across v7x's two TensorCores; the
            # trailing reduction axis keeps each core's output block resident.
            dimension_semantics=("parallel", "arbitrary"),
            vmem_limit_bytes=32 * 1024 * 1024,
        ),
        cost_estimate=pl.CostEstimate(
            flops=4 * n,
            transcendentals=n,
            bytes_accessed=in_bytes + ncores * 8 * LANE * 4,
        ),
    )(x2, y2)

    main_sum = jnp.sum(partials)   # single cross-lane reduction, once, in JAX

    if tail:
        dt = (xf[rows * LANE:].astype(jnp.float32)
              - yf[rows * LANE:].astype(jnp.float32))
        main_sum = main_sum + jnp.sum(jnp.sqrt(dt * dt + eps2))

    return main_sum / jnp.float32(n)


if __name__ == "__main__":
    key = jax.random.PRNGKey(0)
    kx, ky, ka, kb = jax.random.split(key, 4)

    # Small NCHW shapes consistent with an image-restoration loss.
    x = jax.random.normal(kx, (2, 4, 16, 16), dtype=jnp.float32)
    y = jax.random.normal(ky, (2, 4, 16, 16), dtype=jnp.float32)
    loss = jax.block_until_ready(charbonnier_loss(x, y, eps=1e-3))
    diff = x - y
    ref = jnp.mean(jnp.sqrt(diff * diff + 1e-3 * 1e-3))
    assert jnp.allclose(loss, ref, rtol=1e-5, atol=1e-6), (loss, ref)

    # Second check exercises the ragged-block mask, the 2-way "parallel" axis
    # and the non-128-aligned JAX tail path.
    a = jax.random.normal(ka, (3, 3, 17, 19), dtype=jnp.float32)
    b = jax.random.normal(kb, (3, 3, 17, 19), dtype=jnp.float32)
    loss2 = jax.block_until_ready(charbonnier_loss(a, b, eps=1e-3))
    d2 = a - b
    ref2 = jnp.mean(jnp.sqrt(d2 * d2 + 1e-3 * 1e-3))
    assert jnp.allclose(loss2, ref2, rtol=1e-5, atol=1e-6), (loss2, ref2)

    print("KERNEL_OK")
</pallas_src>

<mosaic_0001>
module attributes {stable_mosaic.version = 11 : i64} {
  func.func @_charbonnier_kernel(%arg0: i32, %arg1: i32, %arg2: memref<16x128xf32, #tpu.memory_space<vmem>>, %arg3: memref<16x128xf32, #tpu.memory_space<vmem>>, %arg4: memref<8x128xf32, #tpu.memory_space<vmem>>) attributes {dimension_semantics = [#tpu.dimension_semantics<parallel>, #tpu.dimension_semantics<arbitrary>], iteration_bounds = array<i64: 1, 1>, scalar_prefetch = 0 : i64, scratch_operands = 0 : i64, tpu.core_type = #tpu.core_type<tc>, window_params = [{transform_indices = @transform_0, window_bounds = array<i64: 16, 128>}, {transform_indices = @transform_1, window_bounds = array<i64: 16, 128>}, {transform_indices = @transform_2, window_bounds = array<i64: 8, 128>}]} {
    %c0_i32 = arith.constant 0 : i32
    %0 = arith.cmpi eq, %arg1, %c0_i32 : i32
    %1 = arith.extui %0 : i1 to i32
    %c0_i32_0 = arith.constant 0 : i32
    %2 = arith.cmpi ne, %1, %c0_i32_0 : i32
    scf.if %2 {
      %cst_10 = arith.constant 0.000000e+00 : f32
      %16 = vector.broadcast %cst_10 : f32 to vector<8x128xf32>
      %c0_11 = arith.constant 0 : index
      %c0_12 = arith.constant 0 : index
      %17 = vector.load %arg4[%c0_11, %c0_12] : memref<8x128xf32, #tpu.memory_space<vmem>>, vector<8x128xf32>
      tpu.vector_store %arg4[%c0_11, %c0_12], %16 {strides = array<i32>} : memref<8x128xf32, #tpu.memory_space<vmem>>, vector<8x128xf32>,
    } else {
    }
    %cst = arith.constant 1.000000e-03 : f32
    %cst_1 = arith.constant 1.000000e-03 : f32
    %3 = arith.mulf %cst, %cst_1 : f32
    %c0 = arith.constant 0 : index
    %c0_2 = arith.constant 0 : index
    %4 = vector.load %arg2[%c0, %c0_2] : memref<16x128xf32, #tpu.memory_space<vmem>>, vector<16x128xf32>
    %c0_3 = arith.constant 0 : index
    %c0_4 = arith.constant 0 : index
    %5 = vector.load %arg3[%c0_3, %c0_4] : memref<16x128xf32, #tpu.memory_space<vmem>>, vector<16x128xf32>
    %6 = arith.subf %4, %5 : vector<16x128xf32>
    %7 = arith.mulf %6, %6 : vector<16x128xf32>
    %8 = vector.broadcast %3 : f32 to vector<16x128xf32>
    %9 = arith.addf %7, %8 : vector<16x128xf32>
    %10 = math.sqrt %9 : vector<16x128xf32>
    %c0_5 = arith.constant 0 : index
    %c0_6 = arith.constant 0 : index
    %11 = vector.load %arg4[%c0_5, %c0_6] : memref<8x128xf32, #tpu.memory_space<vmem>>, vector<8x128xf32>
    %12 = vector.shape_cast %10 : vector<16x128xf32> to vector<2x8x128xf32>
    %cst_7 = arith.constant dense<0.000000e+00> : vector<8x128xf32>
    %13 = vector.multi_reduction <add>, %12, %cst_7 [0] : vector<2x8x128xf32> to vector<8x128xf32>
    %14 = arith.addf %11, %13 : vector<8x128xf32>
    %c0_8 = arith.constant 0 : index
    %c0_9 = arith.constant 0 : index
    %15 = vector.load %arg4[%c0_8, %c0_9] : memref<8x128xf32, #tpu.memory_space<vmem>>, vector<8x128xf32>
    tpu.vector_store %arg4[%c0_8, %c0_9], %14 {strides = array<i32>} : memref<8x128xf32, #tpu.memory_space<vmem>>, vector<8x128xf32>,
    return
  }
  func.func @transform_0(%arg0: i32, %arg1: i32) -> (i32, i32) {
    %c1_i32 = arith.constant 1 : i32
    %0 = arith.muli %arg0, %c1_i32 : i32
    %1 = arith.addi %0, %arg1 : i32
    %c0_i32 = arith.constant 0 : i32
    %2 = arith.minsi %1, %c0_i32 : i32
    %c0_i32_0 = arith.constant 0 : i32
    %c0_i32_1 = arith.constant 0 : i32
    return %2, %c0_i32_0 : i32, i32
  }
  func.func @transform_1(%arg0: i32, %arg1: i32) -> (i32, i32) {
    %c1_i32 = arith.constant 1 : i32
    %0 = arith.muli %arg0, %c1_i32 : i32
    %1 = arith.addi %0, %arg1 : i32
    %c0_i32 = arith.constant 0 : i32
    %2 = arith.minsi %1, %c0_i32 : i32
    %c0_i32_0 = arith.constant 0 : i32
    %c0_i32_1 = arith.constant 0 : i32
    return %2, %c0_i32_0 : i32, i32
  }
  func.func @transform_2(%arg0: i32, %arg1: i32) -> (i32, i32) {
    %c0_i32 = arith.constant 0 : i32
    %c0_i32_0 = arith.constant 0 : i32
    return %arg0, %c0_i32 : i32, i32
  }
}

</mosaic_0001>

<llo_original>
// kernel: tpu_custom_call.1
$region0: #{tpu_custom_call.1}
  #allocation0 [shape = 'u32[]', space=smem, size = 0x4, offset = 0x4, fixed_abs, tag = 'smem constant byte address 0x4 - core index']
  #allocation1 [shape = 'u32[72,128]{1,0:T(1,128)}', space=vmem, size = 0x9000, scoped, tag = 'internal scratch']
  %s0 = inlined_call_operand.hbm [shape: f32[16,128], index: 0, kind: input, shape index: {}]
  %s1 = inlined_call_operand.hbm [shape: f32[16,128], index: 1, kind: input, shape index: {}]
  %s2 = inlined_call_operand.hbm [shape: f32[8,128], index: 2, kind: output, shape index: {}]
  %s3 = sld [smem:[#allocation0]]
  $region30: #{tpu_custom_call.1} parent=0
    _
  %s5 = ssub.s32 1, %s3
  %s6 = scalar_select 0, %s5, %s3
  $region1: #{tpu_custom_call.1} parent=0
    #allocation2 [shape = 'u8[8192]{0}', space=vmem, size = 0x2000, scoped, tag = 'input window, operand 0, single buffered']
    #allocation3 [shape = 's32[1]{0}', space=sflag, size = 0x4, scoped, tag = 'scoped memory for tpu_custom_call.1']
    #allocation4 [shape = 's32[1]{0}', space=sflag, size = 0x4, scoped, tag = 'scoped memory for tpu_custom_call.1']
    #allocation5 [shape = 'u8[8192]{0}', space=vmem, size = 0x2000, scoped, tag = 'input window, operand 1, single buffered']
    #allocation6 [shape = 's32[1]{0}', space=sflag, size = 0x4, scoped, tag = 'scoped memory for tpu_custom_call.1']
    #allocation7 [shape = 'u8[4096]{0}', space=vmem, size = 0x1000, scoped, tag = 'output window, operand 0, single buffered']
    %7 = vsyncpa [#allocation3], 0
    %8 = vsyncpa [#allocation6], 0
    %9 = vsyncpa [#allocation4], 0
    // Predicated region
    $region2: #{tpu_custom_call.1} parent=1 // pred_check
      _
    $region3: #{tpu_custom_call.1} parent=1 // pred_check_branch
      %11 = sbr.rel (0) target = $region5
    $region4: #{tpu_custom_call.1} parent=1 // pred_region
      %s12 = sadd.s32 0, 0
      %p13 = scmp.lt.s32.totalorder %s12, 0
      %s14 = scalar_select %p13, %s12, 0
      %s15 = smul.u32 2, %s14
      %17 = vsyncadd [#allocation3], 0
      %s18 = smul.addr %s15, 8
      %s19 = scalar_lea.hbm %s0, %s18
      %s20 = sshll.u32 %s19, 4
      %s21 = int_to_ptr.hbm [resolvable:$true] %s20
      %s22 = sshll.u32 [#allocation2], 4
      %s23 = int_to_ptr.vmem [resolvable:$true] %s22
      %28 = dma.hbm_to_vmem [thread:$0]  %s21, 256, %s23, [#allocation3], 128, 128, 8
    $region5: #{tpu_custom_call.1} parent=1 // pred_fallthru
      _
    // Predicated region
    $region6: #{tpu_custom_call.1} parent=1 // pred_check
      _
    $region7: #{tpu_custom_call.1} parent=1 // pred_check_branch
      %30 = sbr.rel (0) target = $region9
    $region8: #{tpu_custom_call.1} parent=1 // pred_region
      %s31 = sadd.s32 0, 0
      %p32 = scmp.lt.s32.totalorder %s31, 0
      %s33 = scalar_select %p32, %s31, 0
      %s34 = smul.u32 2, %s33
      %36 = vsyncadd [#allocation6], 0
      %s37 = smul.addr %s34, 8
      %s38 = scalar_lea.hbm %s1, %s37
      %s39 = sshll.u32 %s38, 4
      %s40 = int_to_ptr.hbm [resolvable:$true] %s39
      %s41 = sshll.u32 [#allocation5], 4
      %s42 = int_to_ptr.vmem [resolvable:$true] %s41
      %47 = dma.hbm_to_vmem [thread:$0]  %s40, 256, %s42, [#allocation6], 128, 128, 8
    $region9: #{tpu_custom_call.1} parent=1 // pred_fallthru
      _
    // Predicated region
    $region10: #{tpu_custom_call.1} parent=1 // pred_check
      _
    $region11: #{tpu_custom_call.1} parent=1 // pred_check_branch
      %49 = sbr.rel (0) target = $region13
    $region12: #{tpu_custom_call.1} parent=1 // pred_region
      %51 = dma.done [#allocation3], 256
    $region13: #{tpu_custom_call.1} parent=1 // pred_fallthru
      _
    // Predicated region
    $region14: #{tpu_custom_call.1} parent=1 // pred_check
      _
    $region15: #{tpu_custom_call.1} parent=1 // pred_check_branch
      %53 = sbr.rel (0) target = $region17
    $region16: #{tpu_custom_call.1} parent=1 // pred_region
      %55 = dma.done [#allocation6], 256
    $region17: #{tpu_custom_call.1} parent=1 // pred_fallthru
      _
    %s56 = sadd.s32 0, 0
    %p57 = scmp.lt.s32.totalorder %s56, 0
    %s58 = scalar_select %p57, %s56, 0
    %s59 = smul.u32 2, %s58
    %s60 = sadd.s32 0, 0
    %p61 = scmp.lt.s32.totalorder %s60, 0
    %s62 = scalar_select %p61, %s60, 0
    %s63 = smul.u32 2, %s62
    %p64 = scmp.eq.s32.totalorder 0, 0
    // Predicated region
    $region18: #{tpu_custom_call.1} parent=1 // pred_check
      %p65 = pneg %p64
    $region19: #{tpu_custom_call.1} parent=1 // pred_check_branch
      %67 = sbr.rel (%p65) target = $region21
    $region20: #{tpu_custom_call.1} parent=1 // pred_region
      %68 = vst [vmem:[#allocation7] sm:$0xff] 0.0
    $region21: #{tpu_custom_call.1} parent=1 // pred_fallthru
      _
    %v69 = vld [vmem:[#allocation2] sm:$0xff]
    %v70 = vld [vmem:[#allocation2 + $0x8] sm:$0xff]
    %v71 = vld [vmem:[#allocation5] sm:$0xff]
    %v72 = vld [vmem:[#allocation5 + $0x8] sm:$0xff]
    %v73 = vsub.f32 %v69, %v71
    %v74 = vsub.f32 %v70, %v72
    %v75 = vmul.f32 %v73, %v73
    %v76 = vmul.f32 %v74, %v74
    %v77 = vadd.f32 %v75, 1.0000001e-06
    %v78 = vadd.f32 %v76, 1.0000001e-06
    %v79 = vrsqrt.pop %v77
    %v80 = vmul.f32 %v79, %v77
    %v81 = vmul.f32 %v80, %v79
    %v82 = vmul.f32 0.5, %v81
    %v83 = vsub.f32 1.5, %v82
    %v84 = vmul.f32 %v79, %v83
    %v85 = vmul.f32 %v77, %v84
    %vm86 = vcmp.eq.f32.partialorder %v77, inf
    %v87 = vsel %vm86, %v77, %v85
    %vm88 = vcmp.eq.f32.partialorder %v77, 0.0
    %v89 = vand.u32 %v77, 2147483648
    %v90 = vsel %vm88, %v89, %v87
    %v91 = vrsqrt.pop %v78
    %v92 = vmul.f32 %v91, %v78
    %v93 = vmul.f32 %v92, %v91
    %v94 = vmul.f32 0.5, %v93
    %v95 = vsub.f32 1.5, %v94
    %v96 = vmul.f32 %v91, %v95
    %v97 = vmul.f32 %v78, %v96
    %vm98 = vcmp.eq.f32.partialorder %v78, inf
    %v99 = vsel %vm98, %v78, %v97
    %vm100 = vcmp.eq.f32.partialorder %v78, 0.0
    %v101 = vand.u32 %v78, 2147483648
    %v102 = vsel %vm100, %v101, %v99
    %v103 = vld [vmem:[#allocation7] sm:$0xff]
    %v104 = vadd.f32 %v90, %v102
    %v105 = vadd.f32 %v103, %v104
    %106 = vst [vmem:[#allocation7] sm:$0xff] %v105
    // Predicated region
    $region22: #{tpu_custom_call.1} parent=1 // pred_check
      _
    $region23: #{tpu_custom_call.1} parent=1 // pred_check_branch
      %108 = sbr.rel (0) target = $region25
    $region24: #{tpu_custom_call.1} parent=1 // pred_region
      %110 = vsyncadd [#allocation4], 0
      %s112 = sshll.u32 [#allocation7], 4
      %s113 = int_to_ptr.vmem [resolvable:$true] %s112
      %s114 = sshll.u32 %s2, 4
      %s115 = int_to_ptr.hbm [resolvable:$true] %s114
      %117 = dma.vmem_to_hbm [thread:$0]  %s113, 128, %s115, [#allocation4]
    $region25: #{tpu_custom_call.1} parent=1 // pred_fallthru
      _
    // Predicated region
    $region26: #{tpu_custom_call.1} parent=1 // pred_check
      _
    $region27: #{tpu_custom_call.1} parent=1 // pred_check_branch
      %119 = sbr.rel (0) target = $region29
    $region28: #{tpu_custom_call.1} parent=1 // pred_region
      %121 = dma.done [#allocation4], 128
    $region29: #{tpu_custom_call.1} parent=1 // pred_fallthru
      _
    %122 = vsyncpa [#allocation3], 1
    %123 = vsyncpa [#allocation6], 1
    %124 = vsyncpa [#allocation4], 1

</llo_original>
